<compile_context>
chip_gen: v7x
topology: tpu7x:2x2x1
jax: 0.10.0
libtpu: 0.0.40
codegen_flags: <defaults>
</compile_context>

<pallas_src>
import jax
import jax.numpy as jnp
from jax.experimental import pallas as pl
from jax.experimental.pallas import tpu as pltpu

HIDDEN = 49  # matches nn.Linear(input_dim, 49) / nn.Linear(49, 49)


def _round_up(x: int, m: int) -> int:
    return (x + m - 1) // m * m


# ----------------------------------------------------------------------------
# Fused MLP kernel: out = relu(relu(x@W1+b1)@W2+b2)@W3 + b3
# All weights/biases are small (<= 128x128) and fully resident in VMEM; only
# the batch dimension is tiled by the grid.
# ----------------------------------------------------------------------------
def _mlp_kernel(x_ref, w1_ref, b1_ref, w2_ref, b2_ref, w3_ref, b3_ref, o_ref):
    # Layer 1: full f32 (K = input_dim is tiny; keeps parity with the f32
    # PyTorch layer on the raw inputs).
    h = jnp.dot(x_ref[...], w1_ref[...], preferred_element_type=jnp.float32)
    h = jnp.maximum(h + b1_ref[...], 0.0)
    # Layer 2: bf16 MXU inputs, f32 accumulate / bias / ReLU.
    h = jnp.dot(h.astype(w2_ref.dtype), w2_ref[...],
                preferred_element_type=jnp.float32)
    h = jnp.maximum(h + b2_ref[...], 0.0)
    # Layer 3 (no activation): bf16 MXU inputs, f32 accumulate / bias.
    h = jnp.dot(h.astype(w3_ref.dtype), w3_ref[...],
                preferred_element_type=jnp.float32)
    o_ref[...] = (h + b3_ref[...]).astype(o_ref.dtype)


# ----------------------------------------------------------------------------
# Parameter handling
# ----------------------------------------------------------------------------
def init_raw_params(key, input_dim: int, output_dim: int):
    """PyTorch-default-style init, PyTorch layouts: w (out,in), b (out,)."""
    def uni(k, shape, fan_in):
        bound = 1.0 / jnp.sqrt(float(fan_in))
        return jax.random.uniform(k, shape, jnp.float32, -bound, bound)

    ks = jax.random.split(key, 6)
    return {
        "w1": uni(ks[0], (HIDDEN, input_dim), input_dim),
        "b1": uni(ks[1], (HIDDEN,), input_dim),
        "w2": uni(ks[2], (HIDDEN, HIDDEN), HIDDEN),
        "b2": uni(ks[3], (HIDDEN,), HIDDEN),
        "w3": uni(ks[4], (output_dim, HIDDEN), HIDDEN),
        "b3": uni(ks[5], (output_dim,), HIDDEN),
    }


def _pad_to(a, shape):
    pads = [(0, t - s) for s, t in zip(a.shape, shape)]
    return jnp.pad(a, pads)


def prepare_params(raw):
    """One-time layout prep (done once, not per forward):
      * transpose to (in, out) layout,
      * zero-pad only the 49-wide hidden axis up to 128 lanes,
      * keep W1 in f32 with its true (input_dim, 128) shape,
      * keep W3 / b3 at the true output width (output is emitted unpadded),
      * cast W2 / W3 to bf16 (MXU-native); biases stay f32.
    Hidden columns 49..127 stay exactly zero through ReLU, so padding never
    changes the result."""
    d_in = raw["w1"].shape[1]
    d_out = raw["w3"].shape[0]
    hp = _round_up(HIDDEN, 128)   # keep 128, not 256: kernel is DMA/overhead bound
    return {
        "w1": _pad_to(raw["w1"].T, (d_in, hp)).astype(jnp.float32),
        "b1": _pad_to(raw["b1"].reshape(1, -1), (1, hp)).astype(jnp.float32),
        "w2": _pad_to(raw["w2"].T, (hp, hp)).astype(jnp.bfloat16),
        "b2": _pad_to(raw["b2"].reshape(1, -1), (1, hp)).astype(jnp.float32),
        "w3": _pad_to(raw["w3"].T, (hp, d_out)).astype(jnp.bfloat16),
        "b3": raw["b3"].reshape(1, -1).astype(jnp.float32),
    }


# ----------------------------------------------------------------------------
# Forward pass (mirrors QNetwork.forward)
# ----------------------------------------------------------------------------
def qnetwork_forward(params, x, *, tm: int = 256):
    """x: (B, input_dim) float32 -> (B, output_dim) float32.  No wrapper-side
    padding, casting or slicing: everything happens inside one pallas_call."""
    B, D = x.shape
    d_in, hp = params["w1"].shape
    n_out = params["w3"].shape[1]
    assert D == d_in, f"x feature dim {D} != network input_dim {d_in}"

    # Batch tiling: a single full-batch tile when it fits (no row padding),
    # else tm-row tiles (tm <= 256-512 to avoid vreg spills; more grid steps
    # is the cheaper axis).  B > 256 -> >= 2 steps, so the "parallel" M axis
    # can be split across v7x's two TensorCores.
    if B <= tm:
        tm_eff = B                      # block dim == full array dim: legal
    else:
        tm_eff = tm
        assert tm_eff % 8 == 0          # sublane alignment for row tiles
    grid = (pl.cdiv(B, tm_eff),)

    return pl.pallas_call(
        _mlp_kernel,
        out_shape=jax.ShapeDtypeStruct((B, n_out), jnp.float32),
        grid=grid,
        in_specs=[
            pl.BlockSpec((tm_eff, d_in), lambda i: (i, 0)),   # x rows, raw f32
            pl.BlockSpec((d_in, hp), lambda i: (0, 0)),       # W1 f32 (resident)
            pl.BlockSpec((1, hp), lambda i: (0, 0)),          # b1
            pl.BlockSpec((hp, hp), lambda i: (0, 0)),         # W2 bf16
            pl.BlockSpec((1, hp), lambda i: (0, 0)),          # b2
            pl.BlockSpec((hp, n_out), lambda i: (0, 0)),      # W3 bf16
            pl.BlockSpec((1, n_out), lambda i: (0, 0)),       # b3
        ],
        out_specs=pl.BlockSpec((tm_eff, n_out), lambda i: (i, 0)),
        compiler_params=pltpu.CompilerParams(
            # Row tiles are independent -> shard across TCs on v7x; harmless
            # (1 TC) on v5e/v6e.  If a v7x bundle dump shows one core doing
            # all tiles, switch to pltpu.CORE_PARALLEL on this axis.
            dimension_semantics=("parallel",),
        ),
    )(x, params["w1"], params["b1"], params["w2"], params["b2"],
      params["w3"], params["b3"])


def reference_forward(raw, x):
    """Pure-JAX float32 reference (matches the PyTorch module exactly)."""
    h = jnp.maximum(x @ raw["w1"].T + raw["b1"], 0.0)
    h = jnp.maximum(h @ raw["w2"].T + raw["b2"], 0.0)
    return h @ raw["w3"].T + raw["b3"]


if __name__ == "__main__":
    # TicTacToe-style shapes: 3x3 board flattened -> 9 states, 9 actions.
    batch, input_dim, output_dim = 32, 9, 9

    key = jax.random.PRNGKey(0)
    k_params, k_x = jax.random.split(key)

    raw = init_raw_params(k_params, input_dim, output_dim)
    params = prepare_params(raw)
    x = jax.random.normal(k_x, (batch, input_dim), jnp.float32)

    fwd = jax.jit(qnetwork_forward)
    y = jax.block_until_ready(fwd(params, x))

    assert y.shape == (batch, output_dim), y.shape
    assert y.dtype == jnp.float32

    # Numerical check vs. the f32 reference (layer 1 is f32; layers 2/3 use
    # bf16 MXU inputs with f32 accumulation -> tight tolerance suffices).
    y_ref = reference_forward(raw, x)
    assert jnp.allclose(y, y_ref, rtol=2e-2, atol=2e-2), (
        float(jnp.max(jnp.abs(y - y_ref))))

    print("KERNEL_OK")
</pallas_src>

<mosaic_0001>
module attributes {stable_mosaic.version = 11 : i64} {
  func.func @_mlp_kernel(%arg0: i32, %arg1: memref<32x9xf32, #tpu.memory_space<vmem>>, %arg2: memref<9x128xf32, #tpu.memory_space<vmem>>, %arg3: memref<1x128xf32, #tpu.memory_space<vmem>>, %arg4: memref<128x128xbf16, #tpu.memory_space<vmem>>, %arg5: memref<1x128xf32, #tpu.memory_space<vmem>>, %arg6: memref<128x9xbf16, #tpu.memory_space<vmem>>, %arg7: memref<1x9xf32, #tpu.memory_space<vmem>>, %arg8: memref<32x9xf32, #tpu.memory_space<vmem>>) attributes {dimension_semantics = [#tpu.dimension_semantics<parallel>], iteration_bounds = array<i64: 1>, scalar_prefetch = 0 : i64, scratch_operands = 0 : i64, tpu.core_type = #tpu.core_type<tc>, window_params = [{transform_indices = @transform_0, window_bounds = array<i64: 32, 9>}, {pipeline_mode = #tpu.pipeline_mode<synchronous>, transform_indices = @transform_1, window_bounds = array<i64: 9, 128>}, {pipeline_mode = #tpu.pipeline_mode<synchronous>, transform_indices = @transform_2, window_bounds = array<i64: 1, 128>}, {pipeline_mode = #tpu.pipeline_mode<synchronous>, transform_indices = @transform_3, window_bounds = array<i64: 128, 128>}, {pipeline_mode = #tpu.pipeline_mode<synchronous>, transform_indices = @transform_4, window_bounds = array<i64: 1, 128>}, {pipeline_mode = #tpu.pipeline_mode<synchronous>, transform_indices = @transform_5, window_bounds = array<i64: 128, 9>}, {pipeline_mode = #tpu.pipeline_mode<synchronous>, transform_indices = @transform_6, window_bounds = array<i64: 1, 9>}, {transform_indices = @transform_7, window_bounds = array<i64: 32, 9>}]} {
    %c0 = arith.constant 0 : index
    %c0_0 = arith.constant 0 : index
    %0 = vector.load %arg1[%c0, %c0_0] : memref<32x9xf32, #tpu.memory_space<vmem>>, vector<32x9xf32>
    %c0_1 = arith.constant 0 : index
    %c0_2 = arith.constant 0 : index
    %1 = vector.load %arg2[%c0_1, %c0_2] : memref<9x128xf32, #tpu.memory_space<vmem>>, vector<9x128xf32>
    %cst = arith.constant dense<0.000000e+00> : vector<32x128xf32>
    %2 = tpu.matmul %0, %1, %cst {dimension_numbers = #tpu.dot_dimension_numbers<[1], [0], [0], [1], [0, 0, 1, 1], [], []>} : vector<32x9xf32>, vector<9x128xf32>, vector<32x128xf32> -> vector<32x128xf32>
    %c0_3 = arith.constant 0 : index
    %c0_4 = arith.constant 0 : index
    %3 = vector.load %arg3[%c0_3, %c0_4] : memref<1x128xf32, #tpu.memory_space<vmem>>, vector<1x128xf32>
    %4 = vector.broadcast %3 : vector<1x128xf32> to vector<32x128xf32>
    %5 = arith.addf %2, %4 : vector<32x128xf32>
    %cst_5 = arith.constant 0.000000e+00 : f32
    %6 = vector.broadcast %cst_5 : f32 to vector<32x128xf32>
    %7 = arith.maximumf %5, %6 : vector<32x128xf32>
    %8 = arith.truncf %7 : vector<32x128xf32> to vector<32x128xbf16>
    %c0_6 = arith.constant 0 : index
    %c0_7 = arith.constant 0 : index
    %9 = vector.load %arg4[%c0_6, %c0_7] : memref<128x128xbf16, #tpu.memory_space<vmem>>, vector<128x128xbf16>
    %cst_8 = arith.constant dense<0.000000e+00> : vector<32x128xf32>
    %10 = tpu.matmul %8, %9, %cst_8 {dimension_numbers = #tpu.dot_dimension_numbers<[1], [0], [0], [1], [0, 0, 1, 1], [], []>} : vector<32x128xbf16>, vector<128x128xbf16>, vector<32x128xf32> -> vector<32x128xf32>
    %c0_9 = arith.constant 0 : index
    %c0_10 = arith.constant 0 : index
    %11 = vector.load %arg5[%c0_9, %c0_10] : memref<1x128xf32, #tpu.memory_space<vmem>>, vector<1x128xf32>
    %12 = vector.broadcast %11 : vector<1x128xf32> to vector<32x128xf32>
    %13 = arith.addf %10, %12 : vector<32x128xf32>
    %cst_11 = arith.constant 0.000000e+00 : f32
    %14 = vector.broadcast %cst_11 : f32 to vector<32x128xf32>
    %15 = arith.maximumf %13, %14 : vector<32x128xf32>
    %16 = arith.truncf %15 : vector<32x128xf32> to vector<32x128xbf16>
    %c0_12 = arith.constant 0 : index
    %c0_13 = arith.constant 0 : index
    %17 = vector.load %arg6[%c0_12, %c0_13] : memref<128x9xbf16, #tpu.memory_space<vmem>>, vector<128x9xbf16>
    %cst_14 = arith.constant dense<0.000000e+00> : vector<32x9xf32>
    %18 = tpu.matmul %16, %17, %cst_14 {dimension_numbers = #tpu.dot_dimension_numbers<[1], [0], [0], [1], [0, 0, 1, 1], [], []>} : vector<32x128xbf16>, vector<128x9xbf16>, vector<32x9xf32> -> vector<32x9xf32>
    %c0_15 = arith.constant 0 : index
    %c0_16 = arith.constant 0 : index
    %19 = vector.load %arg7[%c0_15, %c0_16] : memref<1x9xf32, #tpu.memory_space<vmem>>, vector<1x9xf32>
    %20 = vector.broadcast %19 : vector<1x9xf32> to vector<32x9xf32>
    %21 = arith.addf %18, %20 : vector<32x9xf32>
    %c0_17 = arith.constant 0 : index
    %c0_18 = arith.constant 0 : index
    %22 = vector.load %arg8[%c0_17, %c0_18] : memref<32x9xf32, #tpu.memory_space<vmem>>, vector<32x9xf32>
    tpu.vector_store %arg8[%c0_17, %c0_18], %21 {strides = array<i32>} : memref<32x9xf32, #tpu.memory_space<vmem>>, vector<32x9xf32>,
    return
  }
  func.func @transform_0(%arg0: i32) -> (i32, i32) {
    %c0_i32 = arith.constant 0 : i32
    %c0_i32_0 = arith.constant 0 : i32
    return %arg0, %c0_i32 : i32, i32
  }
  func.func @transform_1(%arg0: i32) -> (i32, i32) {
    %c0_i32 = arith.constant 0 : i32
    %c0_i32_0 = arith.constant 0 : i32
    %c0_i32_1 = arith.constant 0 : i32
    return %c0_i32, %c0_i32_0 : i32, i32
  }
  func.func @transform_2(%arg0: i32) -> (i32, i32) {
    %c0_i32 = arith.constant 0 : i32
    %c0_i32_0 = arith.constant 0 : i32
    %c0_i32_1 = arith.constant 0 : i32
    return %c0_i32, %c0_i32_0 : i32, i32
  }
  func.func @transform_3(%arg0: i32) -> (i32, i32) {
    %c0_i32 = arith.constant 0 : i32
    %c0_i32_0 = arith.constant 0 : i32
    %c0_i32_1 = arith.constant 0 : i32
    return %c0_i32, %c0_i32_0 : i32, i32
  }
  func.func @transform_4(%arg0: i32) -> (i32, i32) {
    %c0_i32 = arith.constant 0 : i32
    %c0_i32_0 = arith.constant 0 : i32
    %c0_i32_1 = arith.constant 0 : i32
    return %c0_i32, %c0_i32_0 : i32, i32
  }
  func.func @transform_5(%arg0: i32) -> (i32, i32) {
    %c0_i32 = arith.constant 0 : i32
    %c0_i32_0 = arith.constant 0 : i32
    %c0_i32_1 = arith.constant 0 : i32
    return %c0_i32, %c0_i32_0 : i32, i32
  }
  func.func @transform_6(%arg0: i32) -> (i32, i32) {
    %c0_i32 = arith.constant 0 : i32
    %c0_i32_0 = arith.constant 0 : i32
    %c0_i32_1 = arith.constant 0 : i32
    return %c0_i32, %c0_i32_0 : i32, i32
  }
  func.func @transform_7(%arg0: i32) -> (i32, i32) {
    %c0_i32 = arith.constant 0 : i32
    %c0_i32_0 = arith.constant 0 : i32
    return %arg0, %c0_i32 : i32, i32
  }
}

</mosaic_0001>

<llo_original>
// kernel: qnetwork_forward.1
$region0: #{qnetwork_forward.1}
  #allocation0 [shape = 'u32[]', space=smem, size = 0x4, offset = 0x4, fixed_abs, tag = 'smem constant byte address 0x4 - core index']
  #allocation1 [shape = 'u32[144,128]{1,0:T(1,128)}', space=vmem, size = 0x12000, scoped, tag = 'internal scratch']
  %s0 = inlined_call_operand.vmem [shape: f32[32,9], index: 0, kind: input, shape index: {}]
  %s1 = inlined_call_operand.vmem [shape: f32[9,128], index: 1, kind: input, shape index: {}]
  %s2 = inlined_call_operand.vmem [shape: f32[1,128], index: 2, kind: input, shape index: {}]
  %s3 = inlined_call_operand.vmem [shape: bf16[128,128], index: 3, kind: input, shape index: {}]
  %s4 = inlined_call_operand.vmem [shape: f32[1,128], index: 4, kind: input, shape index: {}]
  %s5 = inlined_call_operand.vmem [shape: bf16[128,9], index: 5, kind: input, shape index: {}]
  %s6 = inlined_call_operand.vmem [shape: f32[1,9], index: 6, kind: input, shape index: {}]
  %s7 = inlined_call_operand.vmem [shape: f32[32,9], index: 7, kind: output, shape index: {}]
  %s8 = sld [smem:[#allocation0]]
  $region38: #{qnetwork_forward.1} parent=0
    _
  %s10 = ssub.s32 1, %s8
  %s11 = scalar_select 0, %s10, %s8
  // Predicated region
  $region2: #{qnetwork_forward.1} parent=0 // pred_check
    _
  $region3: #{qnetwork_forward.1} parent=0 // pred_check_branch
    %13 = sbr.rel (0) target = $region5
  $region4: #{qnetwork_forward.1} parent=0 // pred_region
    _
  $region5: #{qnetwork_forward.1} parent=0 // pred_fallthru
    _
  // Predicated region
  $region6: #{qnetwork_forward.1} parent=0 // pred_check
    _
  $region7: #{qnetwork_forward.1} parent=0 // pred_check_branch
    %15 = sbr.rel (0) target = $region9
  $region8: #{qnetwork_forward.1} parent=0 // pred_region
    _
  $region9: #{qnetwork_forward.1} parent=0 // pred_fallthru
    _
  // Predicated region
  $region10: #{qnetwork_forward.1} parent=0 // pred_check
    _
  $region11: #{qnetwork_forward.1} parent=0 // pred_check_branch
    %17 = sbr.rel (0) target = $region13
  $region12: #{qnetwork_forward.1} parent=0 // pred_region
    _
  $region13: #{qnetwork_forward.1} parent=0 // pred_fallthru
    _
  // Predicated region
  $region14: #{qnetwork_forward.1} parent=0 // pred_check
    _
  $region15: #{qnetwork_forward.1} parent=0 // pred_check_branch
    %19 = sbr.rel (0) target = $region17
  $region16: #{qnetwork_forward.1} parent=0 // pred_region
    _
  $region17: #{qnetwork_forward.1} parent=0 // pred_fallthru
    _
  // Predicated region
  $region18: #{qnetwork_forward.1} parent=0 // pred_check
    _
  $region19: #{qnetwork_forward.1} parent=0 // pred_check_branch
    %21 = sbr.rel (0) target = $region21
  $region20: #{qnetwork_forward.1} parent=0 // pred_region
    _
  $region21: #{qnetwork_forward.1} parent=0 // pred_fallthru
    _
  // Predicated region
  $region22: #{qnetwork_forward.1} parent=0 // pred_check
    _
  $region23: #{qnetwork_forward.1} parent=0 // pred_check_branch
    %23 = sbr.rel (0) target = $region25
  $region24: #{qnetwork_forward.1} parent=0 // pred_region
    _
  $region25: #{qnetwork_forward.1} parent=0 // pred_fallthru
    _
  // Predicated region
  $region26: #{qnetwork_forward.1} parent=0 // pred_check
    _
  $region27: #{qnetwork_forward.1} parent=0 // pred_check_branch
    %25 = sbr.rel (0) target = $region29
  $region28: #{qnetwork_forward.1} parent=0 // pred_region
    _
  $region29: #{qnetwork_forward.1} parent=0 // pred_fallthru
    _
  %v27 = vld [vmem:[%s0] sm:$0xff]
  %v28 = vld [vmem:[%s0 + $0x8] sm:$0xff]
  %v29 = vld [vmem:[%s0 + $0x10] sm:$0xff]
  %v30 = vld [vmem:[%s0 + $0x18] sm:$0xff]
  %v31 = vld [vmem:[%s1] sm:$0xff]
  %v32 = vld [vmem:[%s1 + $0x8] sm:$0x1]
  %v33 = vld [vmem:[%s2] sm:$0x1]
  %v35 = vlaneseq
  %v36 = vshrl.u32 %v35, 7
  %v37 = vsub.s32 0, %v36
  %v38 = vrot.slane %v33, %v37
  %vm40 = vcmask 72704
  %v42 = vsel %vm40, %v27, 0
  %v45 = vsel %vm40, %v28, 0
  %v48 = vsel %vm40, %v29, 0
  %v51 = vsel %vm40, %v30, 0
  %vm53 = vcmask 1040384
  %v55 = vsel %vm53, %v32, 0
  %57 = vmatprep.subr.mxu0 0.0
  %58 = vmatpush1.msra.mxu0 %v31
  %59 = vmatprep.subr.mxu0 0.0
  %60 = vmatpush1.msra.mxu0 %v55
  %61 = vmatprep.subr.mxu0 0.0
  %62 = vmatpush1.msra.mxu0 0.0
  %63 = vmatprep.subr.mxu0 0.0
  %64 = vmatpush1.msra.mxu0 0.0
  %65 = vmatprep.subr.mxu0 0.0
  %66 = vmatpush1.msra.mxu0 0.0
  %67 = vmatprep.subr.mxu0 0.0
  %68 = vmatpush1.msra.mxu0 0.0
  %69 = vmatprep.subr.mxu0 0.0
  %70 = vmatpush1.msra.mxu0 0.0
  %71 = vmatprep.subr.mxu0 0.0
  %72 = vmatpush1.msra.mxu0 0.0
  %73 = vmatprep.subr.mxu0 0.0
  %74 = vmatpush1.msra.mxu0 0.0
  %75 = vmatprep.subr.mxu0 0.0
  %76 = vmatpush1.msra.mxu0 0.0
  %77 = vmatprep.subr.mxu0 0.0
  %78 = vmatpush1.msra.mxu0 0.0
  %79 = vmatprep.subr.mxu0 0.0
  %80 = vmatpush1.msra.mxu0 0.0
  %81 = vmatprep.subr.mxu0 0.0
  %82 = vmatpush1.msra.mxu0 0.0
  %83 = vmatprep.subr.mxu0 0.0
  %84 = vmatpush1.msra.mxu0 0.0
  %85 = vmatprep.subr.mxu0 0.0
  %86 = vmatpush1.msra.mxu0 0.0
  %87 = vmatprep.subr.mxu0 0.0
  %88 = vmatpush1.msra.mxu0 0.0
  %89 = vmatprep.subr.mxu0 0.0
  %90 = vmatpush1.msra.mxu0 0.0
  %91 = vmatprep.subr.mxu0 0.0
  %92 = vmatpush1.msra.mxu0 0.0
  %93 = vmatprep.subr.mxu0 0.0
  %94 = vmatpush1.msra.mxu0 0.0
  %95 = vmatprep.subr.mxu0 0.0
  %96 = vmatpush1.msra.mxu0 0.0
  %97 = vmatprep.subr.mxu0 0.0
  %98 = vmatpush1.msra.mxu0 0.0
  %99 = vmatprep.subr.mxu0 0.0
  %100 = vmatpush1.msra.mxu0 0.0
  %101 = vmatprep.subr.mxu0 0.0
  %102 = vmatpush1.msra.mxu0 0.0
  %103 = vmatprep.subr.mxu0 0.0
  %104 = vmatpush1.msra.mxu0 0.0
  %105 = vmatprep.subr.mxu0 0.0
  %106 = vmatpush1.msra.mxu0 0.0
  %107 = vmatprep.subr.mxu0 0.0
  %108 = vmatpush1.msra.mxu0 0.0
  %109 = vmatprep.subr.mxu0 0.0
  %110 = vmatpush1.msra.mxu0 0.0
  %111 = vmatprep.subr.mxu0 0.0
  %112 = vmatpush1.msra.mxu0 0.0
  %113 = vmatprep.subr.mxu0 0.0
  %114 = vmatpush1.msra.mxu0 0.0
  %115 = vmatprep.subr.mxu0 0.0
  %116 = vmatpush1.msra.mxu0 0.0
  %117 = vmatprep.subr.mxu0 0.0
  %118 = vmatpush1.msra.mxu0 0.0
  %119 = vmatprep.subr.mxu0 0.0
  %120 = vmatpush1.msra.mxu0 0.0
  %121 = vmatprep.mubr.f32.mxu0 0.0
  %122 = vmatmul.mubr.f32.gmra.mrb[0].mxu0 %v42
  %v123 = vpop.f32.mrb[0].mxu0
  %v124 = vadd.f32 %v38, %v123
  %v125 = vpop.f32.mrb[0].mxu0
  %126 = vmatprep.mubr.f32.mxu0 0.0
  %127 = vmatmul.mubr.f32.gmra.mrb[0].mxu0 %v45
  %v128 = vpop.f32.mrb[0].mxu0
  %v129 = vadd.f32 %v38, %v128
  %v130 = vpop.f32.mrb[0].mxu0
  %131 = vmatprep.mubr.f32.mxu0 0.0
  %132 = vmatmul.mubr.f32.gmra.mrb[0].mxu0 %v48
  %v133 = vpop.f32.mrb[0].mxu0
  %v134 = vadd.f32 %v38, %v133
  %v135 = vpop.f32.mrb[0].mxu0
  %136 = vmatprep.mubr.f32.mxu0 0.0
  %137 = vmatmul.mubr.f32.gmra.mrb[0].mxu0 %v51
  %v138 = vpop.f32.mrb[0].mxu0
  %v139 = vadd.f32 %v38, %v138
  %v140 = vpop.f32.mrb[0].mxu0
  %141 = vdwg.mxu0
  %v142 = vmax.f32 %v124, 0.0
  %v143 = vmax.f32 %v129, 0.0
  %v144 = vmax.f32 %v134, 0.0
  %v145 = vmax.f32 %v139, 0.0
  %v146 = vpack.c.bf16 %v143, %v142
  %v147 = vpack.c.bf16 %v145, %v144
  %v148 = vld [vmem:[%s3] sm:$0xf]
  %v149 = vld [vmem:[%s3 + $0x4] sm:$0xf]
  %v150 = vld [vmem:[%s3 + $0x8] sm:$0xf]
  %v151 = vld [vmem:[%s3 + $0xc] sm:$0xf]
  %v152 = vld [vmem:[%s3 + $0x10] sm:$0xf]
  %v153 = vld [vmem:[%s3 + $0x14] sm:$0xf]
  %v154 = vld [vmem:[%s3 + $0x18] sm:$0xf]
  %v155 = vld [vmem:[%s3 + $0x1c] sm:$0xf]
  %v156 = vld [vmem:[%s3 + $0x20] sm:$0xf]
  %v157 = vld [vmem:[%s3 + $0x24] sm:$0xf]
  %v158 = vld [vmem:[%s3 + $0x28] sm:$0xf]
  %v159 = vld [vmem:[%s3 + $0x2c] sm:$0xf]
  %v160 = vld [vmem:[%s3 + $0x30] sm:$0xf]
  %v161 = vld [vmem:[%s3 + $0x34] sm:$0xf]
  %v162 = vld [vmem:[%s3 + $0x38] sm:$0xf]
  %v163 = vld [vmem:[%s3 + $0x3c] sm:$0xf]
  %v164 = vld [vmem:[%s4] sm:$0x1]
  %v166 = vlaneseq
  %v167 = vshrl.u32 %v166, 7
  %v168 = vsub.s32 0, %v167
  %v169 = vrot.slane %v164, %v168
  %v187 = vunpack.c.l.b16 %v148
  %v188 = vunpack.c.l.b16 %v149
  %v189 = vunpack.c.l.b16 %v150
  %v190 = vunpack.c.l.b16 %v151
  %v191 = vunpack.c.l.b16 %v152
  %v192 = vunpack.c.l.b16 %v153
  %v193 = vunpack.c.l.b16 %v154
  %v194 = vunpack.c.l.b16 %v155
  %v195 = vunpack.c.l.b16 %v156
  %v196 = vunpack.c.l.b16 %v157
  %v197 = vunpack.c.l.b16 %v158
  %v198 = vunpack.c.l.b16 %v159
  %v199 = vunpack.c.l.b16 %v160
  %v200 = vunpack.c.l.b16 %v161
  %v201 = vunpack.c.l.b16 %v162
  %v202 = vunpack.c.l.b16 %v163
  %v203 = vpack.c.b16 %v188, %v187
  %v204 = vpack.c.b16 %v190, %v189
  %v205 = vpack.c.b16 %v192, %v191
  %v206 = vpack.c.b16 %v194, %v193
  %v207 = vpack.c.b16 %v196, %v195
  %v208 = vpack.c.b16 %v198, %v197
  %v209 = vpack.c.b16 %v200, %v199
  %v210 = vpack.c.b16 %v202, %v201
  %219 = vmatprep.subr.bf16.mxu0 0
  %220 = vmatpush1.bf16.msra.mxu0 %v203
  %221 = vmatprep.subr.bf16.mxu0 0
  %222 = vmatpush1.bf16.msra.mxu0 %v204
  %223 = vmatprep.subr.bf16.mxu0 0
  %224 = vmatpush1.bf16.msra.mxu0 %v205
  %225 = vmatprep.subr.bf16.mxu0 0
  %226 = vmatpush1.bf16.msra.mxu0 %v206
  %227 = vmatprep.subr.bf16.mxu0 0
  %228 = vmatpush1.bf16.msra.mxu0 %v207
  %229 = vmatprep.subr.bf16.mxu0 0
  %230 = vmatpush1.bf16.msra.mxu0 %v208
  %231 = vmatprep.subr.bf16.mxu0 0
  %232 = vmatpush1.bf16.msra.mxu0 %v209
  %233 = vmatprep.subr.bf16.mxu0 0
  %234 = vmatpush1.bf16.msra.mxu0 %v210
  %235 = vmatprep.subr.bf16.mxu0 0
  %236 = vmatpush1.bf16.msra.mxu0 0
  %237 = vmatprep.subr.bf16.mxu0 0
  %238 = vmatpush1.bf16.msra.mxu0 0
  %239 = vmatprep.subr.bf16.mxu0 0
  %240 = vmatpush1.bf16.msra.mxu0 0
  %241 = vmatprep.subr.bf16.mxu0 0
  %242 = vmatpush1.bf16.msra.mxu0 0
  %243 = vmatprep.subr.bf16.mxu0 0
  %244 = vmatpush1.bf16.msra.mxu0 0
  %245 = vmatprep.subr.bf16.mxu0 0
  %246 = vmatpush1.bf16.msra.mxu0 0
  %247 = vmatprep.subr.bf16.mxu0 0
  %248 = vmatpush1.bf16.msra.mxu0 0
  %249 = vmatprep.subr.bf16.mxu0 0
  %250 = vmatpush1.bf16.msra.mxu0 0
  %251 = vmatprep.mubr.bf16.mxu0 0
  %252 = vmatmul.mubr.bf16.gmra.mrb[0].mxu0 %v146
  %v253 = vpop.f32.mrb[0].mxu0
  %v254 = vadd.f32 %v169, %v253
  %v255 = vpop.f32.mrb[0].mxu0
  %v256 = vpop.f32.mrb[0].mxu0
  %v257 = vadd.f32 %v169, %v256
  %v258 = vpop.f32.mrb[0].mxu0
  %259 = vmatprep.mubr.bf16.mxu0 0
  %260 = vmatmul.mubr.bf16.gmra.mrb[0].mxu0 %v147
  %v261 = vpop.f32.mrb[0].mxu0
  %v262 = vadd.f32 %v169, %v261
  %v263 = vpop.f32.mrb[0].mxu0
  %v264 = vpop.f32.mrb[0].mxu0
  %v265 = vadd.f32 %v169, %v264
  %v266 = vpop.f32.mrb[0].mxu0
  %267 = vdwg.mxu0
  %v268 = vmax.f32 %v254, 0.0
  %v269 = vmax.f32 %v257, 0.0
  %v270 = vmax.f32 %v262, 0.0
  %v271 = vmax.f32 %v265, 0.0
  %v272 = vpack.c.bf16 %v269, %v268
  %v273 = vpack.c.bf16 %v271, %v270
  %v274 = vld [vmem:[%s5] sm:$0xf]
  %v275 = vld [vmem:[%s5 + $0x4] sm:$0xf]
  %v276 = vld [vmem:[%s5 + $0x8] sm:$0xf]
  %v277 = vld [vmem:[%s5 + $0xc] sm:$0xf]
  %v278 = vld [vmem:[%s5 + $0x10] sm:$0xf]
  %v279 = vld [vmem:[%s5 + $0x14] sm:$0xf]
  %v280 = vld [vmem:[%s5 + $0x18] sm:$0xf]
  %v281 = vld [vmem:[%s5 + $0x1c] sm:$0xf]
  %v282 = vld [vmem:[%s5 + $0x20] sm:$0xf]
  %v283 = vld [vmem:[%s5 + $0x24] sm:$0xf]
  %v284 = vld [vmem:[%s5 + $0x28] sm:$0xf]
  %v285 = vld [vmem:[%s5 + $0x2c] sm:$0xf]
  %v286 = vld [vmem:[%s5 + $0x30] sm:$0xf]
  %v287 = vld [vmem:[%s5 + $0x34] sm:$0xf]
  %v288 = vld [vmem:[%s5 + $0x38] sm:$0xf]
  %v289 = vld [vmem:[%s5 + $0x3c] sm:$0xf]
  %v290 = vld [vmem:[%s6] sm:$0x1]
  %v292 = vlaneseq
  %v293 = vshrl.u32 %v292, 7
  %v294 = vsub.s32 0, %v293
  %v295 = vrot.slane %v290, %v294
  %v313 = vunpack.c.l.b16 %v274
  %v314 = vunpack.c.l.b16 %v275
  %v315 = vunpack.c.l.b16 %v276
  %v316 = vunpack.c.l.b16 %v277
  %v317 = vunpack.c.l.b16 %v278
  %v318 = vunpack.c.l.b16 %v279
  %v319 = vunpack.c.l.b16 %v280
  %v320 = vunpack.c.l.b16 %v281
  %v321 = vunpack.c.l.b16 %v282
  %v322 = vunpack.c.l.b16 %v283
  %v323 = vunpack.c.l.b16 %v284
  %v324 = vunpack.c.l.b16 %v285
  %v325 = vunpack.c.l.b16 %v286
  %v326 = vunpack.c.l.b16 %v287
  %v327 = vunpack.c.l.b16 %v288
  %v328 = vunpack.c.l.b16 %v289
  %v329 = vpack.c.b16 %v314, %v313
  %v330 = vpack.c.b16 %v316, %v315
  %v331 = vpack.c.b16 %v318, %v317
  %v332 = vpack.c.b16 %v320, %v319
  %v333 = vpack.c.b16 %v322, %v321
  %v334 = vpack.c.b16 %v324, %v323
  %v335 = vpack.c.b16 %v326, %v325
  %v336 = vpack.c.b16 %v328, %v327
  %345 = vmatprep.subr.bf16.mxu0 0
  %346 = vmatpush1.bf16.msra.mxu0 %v329
  %347 = vmatprep.subr.bf16.mxu0 0
  %348 = vmatpush1.bf16.msra.mxu0 %v330
  %349 = vmatprep.subr.bf16.mxu0 0
  %350 = vmatpush1.bf16.msra.mxu0 %v331
  %351 = vmatprep.subr.bf16.mxu0 0
  %352 = vmatpush1.bf16.msra.mxu0 %v332
  %353 = vmatprep.subr.bf16.mxu0 0
  %354 = vmatpush1.bf16.msra.mxu0 %v333
  %355 = vmatprep.subr.bf16.mxu0 0
  %356 = vmatpush1.bf16.msra.mxu0 %v334
  %357 = vmatprep.subr.bf16.mxu0 0
  %358 = vmatpush1.bf16.msra.mxu0 %v335
  %359 = vmatprep.subr.bf16.mxu0 0
  %360 = vmatpush1.bf16.msra.mxu0 %v336
  %361 = vmatprep.subr.bf16.mxu0 0
  %362 = vmatpush1.bf16.msra.mxu0 0
  %363 = vmatprep.subr.bf16.mxu0 0
  %364 = vmatpush1.bf16.msra.mxu0 0
  %365 = vmatprep.subr.bf16.mxu0 0
  %366 = vmatpush1.bf16.msra.mxu0 0
  %367 = vmatprep.subr.bf16.mxu0 0
  %368 = vmatpush1.bf16.msra.mxu0 0
  %369 = vmatprep.subr.bf16.mxu0 0
  %370 = vmatpush1.bf16.msra.mxu0 0
  %371 = vmatprep.subr.bf16.mxu0 0
  %372 = vmatpush1.bf16.msra.mxu0 0
  %373 = vmatprep.subr.bf16.mxu0 0
  %374 = vmatpush1.bf16.msra.mxu0 0
  %375 = vmatprep.subr.bf16.mxu0 0
  %376 = vmatpush1.bf16.msra.mxu0 0
  %377 = vmatprep.mubr.bf16.mxu0 0
  %378 = vmatmul.mubr.bf16.gmra.mrb[0].mxu0 %v272
  %v379 = vpop.f32.mrb[0].mxu0
  %v380 = vadd.f32 %v295, %v379
  %v381 = vpop.f32.mrb[0].mxu0
  %v382 = vpop.f32.mrb[0].mxu0
  %v383 = vadd.f32 %v295, %v382
  %v384 = vpop.f32.mrb[0].mxu0
  %385 = vmatprep.mubr.bf16.mxu0 0
  %386 = vmatmul.mubr.bf16.gmra.mrb[0].mxu0 %v273
  %v387 = vpop.f32.mrb[0].mxu0
  %v388 = vadd.f32 %v295, %v387
  %v389 = vpop.f32.mrb[0].mxu0
  %v390 = vpop.f32.mrb[0].mxu0
  %v391 = vadd.f32 %v295, %v390
  %v392 = vpop.f32.mrb[0].mxu0
  %393 = vdwg.mxu0
  %394 = vst.msk [vmem:[%s7] sm:$0xff] %vm40, %v380
  %395 = vst.msk [vmem:[%s7 + $0x8] sm:$0xff] %vm40, %v383
  %396 = vst.msk [vmem:[%s7 + $0x10] sm:$0xff] %vm40, %v388
  %397 = vst.msk [vmem:[%s7 + $0x18] sm:$0xff] %vm40, %v391
  // Predicated region
  $region30: #{qnetwork_forward.1} parent=0 // pred_check
    _
  $region31: #{qnetwork_forward.1} parent=0 // pred_check_branch
    %399 = sbr.rel (0) target = $region33
  $region32: #{qnetwork_forward.1} parent=0 // pred_region
    _
  $region33: #{qnetwork_forward.1} parent=0 // pred_fallthru
    _
  // Predicated region
  $region34: #{qnetwork_forward.1} parent=0 // pred_check
    _
  $region35: #{qnetwork_forward.1} parent=0 // pred_check_branch
    %401 = sbr.rel (0) target = $region37
  $region36: #{qnetwork_forward.1} parent=0 // pred_region
    _
  $region37: #{qnetwork_forward.1} parent=0 // pred_fallthru
    _

</llo_original>
